<compile_context>
chip_gen: v5e
topology: v5e:2x2
jax: 0.10.0
libtpu: 0.0.40
codegen_flags: <defaults>
</compile_context>

<pallas_src>
import jax
import jax.numpy as jnp
from jax.experimental import pallas as pl
from jax.experimental.pallas import tpu as pltpu


_N_PAD = 128  # lane-dense padded out_proj width (real logit count = 2)


def _head_kernel(x_ref, w1_ref, b1_ref, w2_ref, b2_ref, o_ref, acc_ref):
    # x_ref:  [tm, tk] bf16        (chunk of the pair-concat CLS activations)
    # w1_ref: [tk, H]  bf16        (chunk of the dense weight)
    # b1_ref: [1, H]   f32
    # w2_ref: [H, 128] bf16        (out_proj, zero-padded past col 2)
    # b2_ref: [1, 128] f32
    # o_ref:  [tm, 128] f32
    # acc_ref:[tm, H]  f32 scratch (dense-layer accumulator, resident over k)
    k = pl.program_id(1)

    @pl.when(k == 0)
    def _():
        acc_ref[...] = jnp.zeros_like(acc_ref)

    # dense: bf16 MXU matmul chunk, f32 accumulation.
    acc_ref[...] += jnp.dot(x_ref[...], w1_ref[...],
                            preferred_element_type=jnp.float32)

    @pl.when(k == pl.num_programs(1) - 1)
    def _():
        h = jnp.tanh(acc_ref[...] + b1_ref[...])               # f32 bias + tanh
        out = jnp.dot(h.astype(jnp.bfloat16), w2_ref[...],     # lane-dense N=128
                      preferred_element_type=jnp.float32)
        o_ref[...] = out + b2_ref[...]


def _round_up(x, m):
    return ((x + m - 1) // m) * m


def _choose_tm(M, tm_max=1024):
    # Aim for >= 2-4 M steps once M is large enough; keep tm a multiple of 256
    # (v6e/v7x MXU, bf16 sublane packing).  tm_max=1024 fits comfortably in
    # v6e's 128 MiB VMEM and in v7x's 32 MiB scoped default with 2H <= 2048.
    if M <= 256:
        return M                       # single M tile; the K axis gives overlap
    return min(_round_up(pl.cdiv(M, 4), 256), tm_max)


def _choose_tk(K, tk_max=512):
    # K = 2*H is the dense reduction axis.  tk must divide K exactly (partial
    # reduction chunks would accumulate garbage) and be a multiple of 128
    # (lane constraint).  2-4 chunks hide the W1 + x DMA behind the MXU.
    if K <= tk_max:
        return K
    for tk in range(tk_max, 127, -128):
        if K % tk == 0:
            return tk
    return K                           # no lane-aligned divisor: single chunk


def _padded_bytes(rows, cols, itemsize):
    # Account for (8, 128) VMEM tiling when sizing the limit.
    return _round_up(rows, 8) * _round_up(cols, 128) * itemsize


def _vmem_limit_bytes(tm, tk, H):
    x_b   = 2 * _padded_bytes(tm, tk, 2)        # double-buffered bf16 x chunk
    w1_b  = 2 * _padded_bytes(tk, H, 2)         # double-buffered bf16 W1 chunk
    b1_b  = 1 * _padded_bytes(1, H, 4)          # single-buffered (resident)
    w2_b  = 1 * _padded_bytes(H, _N_PAD, 2)     # single-buffered (resident)
    b2_b  = 1 * _padded_bytes(1, _N_PAD, 4)     # single-buffered (resident)
    out_b = 2 * _padded_bytes(tm, _N_PAD, 4)
    acc_b = 1 * _padded_bytes(tm, H, 4)
    total = x_b + w1_b + b1_b + w2_b + b2_b + out_b + acc_b
    # 1.5x + 4 MiB headroom for compiler-internal scratch; cap at 32 MiB so the
    # same sizing is portable to v7x's 64 MiB physical / 32 MiB scoped default.
    return min(int(total * 1.5) + (4 << 20), 32 << 20)


def roberta_classification_head(features, w_dense, b_dense, w_out, b_out):
    """features: [B, S, H]; returns f32 logits of shape [B // 2, 2]."""
    B, S, H = features.shape
    assert B % 2 == 0, "batch must be even (pairs of CLS vectors are concatenated)"
    K = 2 * H
    assert w_dense.shape == (K, H) and w_out.shape[0] == H
    n_out = w_out.shape[1]

    # Prologue glue (one small fused XLA op): CLS gather + pair concat + bf16.
    x = features[:, 0, :].reshape(-1, K).astype(jnp.bfloat16)     # [M, 2H]
    M = x.shape[0]

    w1 = w_dense.astype(jnp.bfloat16)                             # [2H, H]
    b1 = b_dense.reshape(1, H).astype(jnp.float32)                # [1, H]

    # Lane-dense out_proj: pad N from 2 -> 128 with zeros; slice after the call.
    w2p = jnp.zeros((H, _N_PAD), jnp.bfloat16).at[:, :n_out].set(
        w_out.astype(jnp.bfloat16))                               # [H, 128]
    b2p = jnp.zeros((1, _N_PAD), jnp.float32).at[:, :n_out].set(
        b_out.astype(jnp.float32))                                # [1, 128]

    tm = _choose_tm(M)
    tk = _choose_tk(K)
    grid = (pl.cdiv(M, tm), K // tk)

    resident = pl.Buffered(1)   # constant-index operands: skip the 2nd buffer

    out = pl.pallas_call(
        _head_kernel,
        out_shape=jax.ShapeDtypeStruct((M, _N_PAD), jnp.float32),
        grid=grid,
        in_specs=[
            pl.BlockSpec((tm, tk), lambda i, k: (i, k)),           # x chunk
            pl.BlockSpec((tk, H), lambda i, k: (k, 0)),            # W1 chunk
            pl.BlockSpec((1, H), lambda i, k: (0, 0),
                         pipeline_mode=resident),                  # b1
            pl.BlockSpec((H, _N_PAD), lambda i, k: (0, 0),
                         pipeline_mode=resident),                  # W2 padded
            pl.BlockSpec((1, _N_PAD), lambda i, k: (0, 0),
                         pipeline_mode=resident),                  # b2 padded
        ],
        out_specs=pl.BlockSpec((tm, _N_PAD), lambda i, k: (i, 0)),
        scratch_shapes=[pltpu.VMEM((tm, H), jnp.float32)],         # dense acc
        compiler_params=pltpu.CompilerParams(
            # M tiles independent; K axis accumulates into resident state.
            # (On v7x, pltpu.CORE_PARALLEL on the M axis would use both TCs.)
            dimension_semantics=("parallel", "arbitrary"),
            vmem_limit_bytes=_vmem_limit_bytes(tm, tk, H),
        ),
    )(x, w1, b1, w2p, b2p)

    return out[:, :n_out]   # [M, 2] f32 logits


def _reference_f32(features, w_dense, b_dense, w_out, b_out):
    x = features[:, 0, :].astype(jnp.float32)
    x = x.reshape(-1, x.shape[-1] * 2)
    x = jnp.tanh(x @ w_dense.astype(jnp.float32) + b_dense.astype(jnp.float32))
    return x @ w_out.astype(jnp.float32) + b_out.astype(jnp.float32)


def _make_inputs(key, B, S, H):
    k_feat, k_w1, k_b1, k_w2, k_b2 = jax.random.split(key, 5)
    features = jax.random.normal(k_feat, (B, S, H), dtype=jnp.float32)
    # Parameters stored as [in, out] so the kernel does x @ W directly.
    w_dense = jax.random.normal(k_w1, (2 * H, H), dtype=jnp.float32) * 0.05
    b_dense = jax.random.normal(k_b1, (H,), dtype=jnp.float32) * 0.05
    w_out = jax.random.normal(k_w2, (H, 2), dtype=jnp.float32) * 0.05
    b_out = jax.random.normal(k_b2, (2,), dtype=jnp.float32) * 0.05
    return features, w_dense, b_dense, w_out, b_out


if __name__ == "__main__":
    k0, k1, k2 = jax.random.split(jax.random.PRNGKey(0), 3)

    # 1) Primary small demo shape consistent with the module: [B, S, H].
    args = _make_inputs(k0, B=4, S=8, H=32)
    logits = jax.block_until_ready(roberta_classification_head(*args))
    ref = _reference_f32(*args)
    assert logits.shape == (2, 2), logits.shape
    # bf16 MXU operands with f32 accumulation vs f32 reference -> loose tol.
    assert jnp.allclose(logits, ref, atol=3e-2, rtol=3e-2), (logits, ref)

    # 2) Exercise the K-chunked accumulator path (K = 1024 -> 2 K steps).
    args2 = _make_inputs(k1, B=8, S=4, H=512)
    logits2 = jax.block_until_ready(roberta_classification_head(*args2))
    ref2 = _reference_f32(*args2)
    assert logits2.shape == (4, 2), logits2.shape
    assert jnp.allclose(logits2, ref2, atol=5e-2, rtol=5e-2), (
        float(jnp.max(jnp.abs(logits2 - ref2))))

    # 3) Exercise M tiling with a partial last tile (M = 260 -> tm = 256).
    args3 = _make_inputs(k2, B=520, S=2, H=64)
    logits3 = jax.block_until_ready(roberta_classification_head(*args3))
    ref3 = _reference_f32(*args3)
    assert logits3.shape == (260, 2), logits3.shape
    assert jnp.allclose(logits3, ref3, atol=3e-2, rtol=3e-2), (
        float(jnp.max(jnp.abs(logits3 - ref3))))

    print("KERNEL_OK")
</pallas_src>

<mosaic_0001>
module attributes {stable_mosaic.version = 11 : i64} {
  func.func @_head_kernel(%arg0: i32, %arg1: i32, %arg2: memref<2x64xbf16, #tpu.memory_space<vmem>>, %arg3: memref<64x32xbf16, #tpu.memory_space<vmem>>, %arg4: memref<1x32xf32, #tpu.memory_space<vmem>>, %arg5: memref<32x128xbf16, #tpu.memory_space<vmem>>, %arg6: memref<1x128xf32, #tpu.memory_space<vmem>>, %arg7: memref<2x128xf32, #tpu.memory_space<vmem>>, %arg8: memref<2x32xf32, #tpu.memory_space<vmem>>) attributes {dimension_semantics = [#tpu.dimension_semantics<parallel>, #tpu.dimension_semantics<arbitrary>], iteration_bounds = array<i64: 1, 1>, scalar_prefetch = 0 : i64, scratch_operands = 1 : i64, tpu.core_type = #tpu.core_type<tc>, window_params = [{transform_indices = @transform_0, window_bounds = array<i64: 2, 64>}, {transform_indices = @transform_1, window_bounds = array<i64: 64, 32>}, {pipeline_mode = #tpu.pipeline_mode<synchronous>, transform_indices = @transform_2, window_bounds = array<i64: 1, 32>}, {pipeline_mode = #tpu.pipeline_mode<synchronous>, transform_indices = @transform_3, window_bounds = array<i64: 32, 128>}, {pipeline_mode = #tpu.pipeline_mode<synchronous>, transform_indices = @transform_4, window_bounds = array<i64: 1, 128>}, {transform_indices = @transform_5, window_bounds = array<i64: 2, 128>}]} {
    %c0_i32 = arith.constant 0 : i32
    %0 = arith.cmpi eq, %arg1, %c0_i32 : i32
    %1 = arith.extui %0 : i1 to i32
    %c0_i32_0 = arith.constant 0 : i32
    %2 = arith.cmpi ne, %1, %c0_i32_0 : i32
    scf.if %2 {
      %cst_10 = arith.constant 0.000000e+00 : f32
      %12 = vector.broadcast %cst_10 : f32 to vector<2x32xf32>
      %c0_11 = arith.constant 0 : index
      %c0_12 = arith.constant 0 : index
      %13 = vector.load %arg8[%c0_11, %c0_12] : memref<2x32xf32, #tpu.memory_space<vmem>>, vector<2x32xf32>
      tpu.vector_store %arg8[%c0_11, %c0_12], %12 {strides = array<i32>} : memref<2x32xf32, #tpu.memory_space<vmem>>, vector<2x32xf32>,
    } else {
    }
    %c0 = arith.constant 0 : index
    %c0_1 = arith.constant 0 : index
    %3 = vector.load %arg8[%c0, %c0_1] : memref<2x32xf32, #tpu.memory_space<vmem>>, vector<2x32xf32>
    %c0_2 = arith.constant 0 : index
    %c0_3 = arith.constant 0 : index
    %4 = vector.load %arg2[%c0_2, %c0_3] : memref<2x64xbf16, #tpu.memory_space<vmem>>, vector<2x64xbf16>
    %c0_4 = arith.constant 0 : index
    %c0_5 = arith.constant 0 : index
    %5 = vector.load %arg3[%c0_4, %c0_5] : memref<64x32xbf16, #tpu.memory_space<vmem>>, vector<64x32xbf16>
    %cst = arith.constant dense<0.000000e+00> : vector<2x32xf32>
    %6 = tpu.matmul %4, %5, %cst {dimension_numbers = #tpu.dot_dimension_numbers<[1], [0], [0], [1], [0, 0, 1, 1], [], []>} : vector<2x64xbf16>, vector<64x32xbf16>, vector<2x32xf32> -> vector<2x32xf32>
    %7 = arith.addf %3, %6 : vector<2x32xf32>
    %c0_6 = arith.constant 0 : index
    %c0_7 = arith.constant 0 : index
    %8 = vector.load %arg8[%c0_6, %c0_7] : memref<2x32xf32, #tpu.memory_space<vmem>>, vector<2x32xf32>
    tpu.vector_store %arg8[%c0_6, %c0_7], %7 {strides = array<i32>} : memref<2x32xf32, #tpu.memory_space<vmem>>, vector<2x32xf32>,
    %c0_i32_8 = arith.constant 0 : i32
    %9 = arith.cmpi eq, %arg1, %c0_i32_8 : i32
    %10 = arith.extui %9 : i1 to i32
    %c0_i32_9 = arith.constant 0 : i32
    %11 = arith.cmpi ne, %10, %c0_i32_9 : i32
    scf.if %11 {
      %c0_10 = arith.constant 0 : index
      %c0_11 = arith.constant 0 : index
      %12 = vector.load %arg8[%c0_10, %c0_11] : memref<2x32xf32, #tpu.memory_space<vmem>>, vector<2x32xf32>
      %c0_12 = arith.constant 0 : index
      %c0_13 = arith.constant 0 : index
      %13 = vector.load %arg4[%c0_12, %c0_13] : memref<1x32xf32, #tpu.memory_space<vmem>>, vector<1x32xf32>
      %14 = vector.broadcast %13 : vector<1x32xf32> to vector<2x32xf32>
      %15 = arith.addf %12, %14 : vector<2x32xf32>
      %16 = math.tanh %15 : vector<2x32xf32>
      %17 = arith.truncf %16 : vector<2x32xf32> to vector<2x32xbf16>
      %c0_14 = arith.constant 0 : index
      %c0_15 = arith.constant 0 : index
      %18 = vector.load %arg5[%c0_14, %c0_15] : memref<32x128xbf16, #tpu.memory_space<vmem>>, vector<32x128xbf16>
      %cst_16 = arith.constant dense<0.000000e+00> : vector<2x128xf32>
      %19 = tpu.matmul %17, %18, %cst_16 {dimension_numbers = #tpu.dot_dimension_numbers<[1], [0], [0], [1], [0, 0, 1, 1], [], []>} : vector<2x32xbf16>, vector<32x128xbf16>, vector<2x128xf32> -> vector<2x128xf32>
      %c0_17 = arith.constant 0 : index
      %c0_18 = arith.constant 0 : index
      %20 = vector.load %arg6[%c0_17, %c0_18] : memref<1x128xf32, #tpu.memory_space<vmem>>, vector<1x128xf32>
      %21 = vector.broadcast %20 : vector<1x128xf32> to vector<2x128xf32>
      %22 = arith.addf %19, %21 : vector<2x128xf32>
      %c0_19 = arith.constant 0 : index
      %c0_20 = arith.constant 0 : index
      %23 = vector.load %arg7[%c0_19, %c0_20] : memref<2x128xf32, #tpu.memory_space<vmem>>, vector<2x128xf32>
      tpu.vector_store %arg7[%c0_19, %c0_20], %22 {strides = array<i32>} : memref<2x128xf32, #tpu.memory_space<vmem>>, vector<2x128xf32>,
    } else {
    }
    return
  }
  func.func @transform_0(%arg0: i32, %arg1: i32) -> (i32, i32) {
    %c0_i32 = arith.constant 0 : i32
    return %arg0, %arg1 : i32, i32
  }
  func.func @transform_1(%arg0: i32, %arg1: i32) -> (i32, i32) {
    %c0_i32 = arith.constant 0 : i32
    %c0_i32_0 = arith.constant 0 : i32
    return %arg1, %c0_i32 : i32, i32
  }
  func.func @transform_2(%arg0: i32, %arg1: i32) -> (i32, i32) {
    %c0_i32 = arith.constant 0 : i32
    %c0_i32_0 = arith.constant 0 : i32
    %c0_i32_1 = arith.constant 0 : i32
    return %c0_i32, %c0_i32_0 : i32, i32
  }
  func.func @transform_3(%arg0: i32, %arg1: i32) -> (i32, i32) {
    %c0_i32 = arith.constant 0 : i32
    %c0_i32_0 = arith.constant 0 : i32
    %c0_i32_1 = arith.constant 0 : i32
    return %c0_i32, %c0_i32_0 : i32, i32
  }
  func.func @transform_4(%arg0: i32, %arg1: i32) -> (i32, i32) {
    %c0_i32 = arith.constant 0 : i32
    %c0_i32_0 = arith.constant 0 : i32
    %c0_i32_1 = arith.constant 0 : i32
    return %c0_i32, %c0_i32_0 : i32, i32
  }
  func.func @transform_5(%arg0: i32, %arg1: i32) -> (i32, i32) {
    %c0_i32 = arith.constant 0 : i32
    %c0_i32_0 = arith.constant 0 : i32
    return %arg0, %c0_i32 : i32, i32
  }
}

</mosaic_0001>

<llo_original>
// kernel: tpu_custom_call.1
$region0: #{tpu_custom_call.1}
  #allocation0 [shape = 'u32[]', space=smem, size = 0x4, offset = 0x4, fixed_abs, tag = 'smem constant byte address 0x4 - core index']
  #allocation1 [shape = 'u32[72,128]{1,0:T(1,128)}', space=vmem, size = 0x9000, scoped, tag = 'internal scratch']
  #allocation2 [shape = 'f32[2,32]{1,0:T(2,128)}', space=vmem, size = 0x400, scoped, tag = 'scratch operand']
  %s0 = inlined_call_operand.vmem [shape: bf16[2,64], index: 0, kind: input, shape index: {}]
  %s1 = inlined_call_operand.vmem [shape: bf16[64,32], index: 1, kind: input, shape index: {}]
  %s2 = inlined_call_operand.vmem [shape: f32[1,32], index: 2, kind: input, shape index: {}]
  %s3 = inlined_call_operand.vmem [shape: bf16[32,128], index: 3, kind: input, shape index: {}]
  %s4 = inlined_call_operand.vmem [shape: f32[1,128], index: 4, kind: input, shape index: {}]
  %s5 = inlined_call_operand.hbm [shape: f32[2,128], index: 5, kind: output, shape index: {}]
  %s6 = sld [smem:[#allocation0]]
  $region38: #{tpu_custom_call.1} parent=0
    _
  %s8 = ssub.s32 1, %s6
  %s9 = scalar_select 0, %s8, %s6
  $region1: #{tpu_custom_call.1} parent=0
    #allocation3 [shape = 'u8[1024]{0}', space=vmem, size = 0x400, scoped, tag = 'output window, operand 0, single buffered']
    #allocation4 [shape = 's32[1]{0}', space=sflag, size = 0x4, scoped, tag = 'scoped memory for tpu_custom_call.1']
    %10 = vsyncpa [#allocation4], 0
    // Predicated region
    $region2: #{tpu_custom_call.1} parent=1 // pred_check
      _
    $region3: #{tpu_custom_call.1} parent=1 // pred_check_branch
      %12 = sbr.rel (0) target = $region5
    $region4: #{tpu_custom_call.1} parent=1 // pred_region
      _
    $region5: #{tpu_custom_call.1} parent=1 // pred_fallthru
      _
    // Predicated region
    $region6: #{tpu_custom_call.1} parent=1 // pred_check
      _
    $region7: #{tpu_custom_call.1} parent=1 // pred_check_branch
      %14 = sbr.rel (0) target = $region9
    $region8: #{tpu_custom_call.1} parent=1 // pred_region
      _
    $region9: #{tpu_custom_call.1} parent=1 // pred_fallthru
      _
    // Predicated region
    $region10: #{tpu_custom_call.1} parent=1 // pred_check
      _
    $region11: #{tpu_custom_call.1} parent=1 // pred_check_branch
      %16 = sbr.rel (0) target = $region13
    $region12: #{tpu_custom_call.1} parent=1 // pred_region
      _
    $region13: #{tpu_custom_call.1} parent=1 // pred_fallthru
      _
    // Predicated region
    $region14: #{tpu_custom_call.1} parent=1 // pred_check
      _
    $region15: #{tpu_custom_call.1} parent=1 // pred_check_branch
      %18 = sbr.rel (0) target = $region17
    $region16: #{tpu_custom_call.1} parent=1 // pred_region
      _
    $region17: #{tpu_custom_call.1} parent=1 // pred_fallthru
      _
    // Predicated region
    $region18: #{tpu_custom_call.1} parent=1 // pred_check
      _
    $region19: #{tpu_custom_call.1} parent=1 // pred_check_branch
      %20 = sbr.rel (0) target = $region21
    $region20: #{tpu_custom_call.1} parent=1 // pred_region
      _
    $region21: #{tpu_custom_call.1} parent=1 // pred_fallthru
      _
    %p22 = scmp.eq.s32.totalorder 0, 0
    // Predicated region
    $region22: #{tpu_custom_call.1} parent=1 // pred_check
      %p23 = pneg %p22
    $region23: #{tpu_custom_call.1} parent=1 // pred_check_branch
      %25 = sbr.rel (%p23) target = $region25
    $region24: #{tpu_custom_call.1} parent=1 // pred_region
      %vm26 = vcmask 254976
      %27 = vst.msk [vmem:[#allocation2] sm:$0x3] %vm26, 0.0
    $region25: #{tpu_custom_call.1} parent=1 // pred_fallthru
      _
    %v28 = vld [vmem:[#allocation2] sm:$0x3]
    %v29 = vld [vmem:[%s0] sm:$0x1]
    %v30 = vld [vmem:[%s1] sm:$0xf]
    %v31 = vld [vmem:[%s1 + $0x4] sm:$0xf]
    %v32 = vld [vmem:[%s1 + $0x8] sm:$0xf]
    %v33 = vld [vmem:[%s1 + $0xc] sm:$0xf]
    %v34 = vld [vmem:[%s1 + $0x10] sm:$0xf]
    %v35 = vld [vmem:[%s1 + $0x14] sm:$0xf]
    %v36 = vld [vmem:[%s1 + $0x18] sm:$0xf]
    %v37 = vld [vmem:[%s1 + $0x1c] sm:$0xf]
    %v46 = vunpack.c.l.b16 %v30
    %v47 = vunpack.c.l.b16 %v31
    %v48 = vunpack.c.l.b16 %v32
    %v49 = vunpack.c.l.b16 %v33
    %v50 = vunpack.c.l.b16 %v34
    %v51 = vunpack.c.l.b16 %v35
    %v52 = vunpack.c.l.b16 %v36
    %v53 = vunpack.c.l.b16 %v37
    %v54 = vpack.c.b16 %v47, %v46
    %v55 = vpack.c.b16 %v49, %v48
    %v56 = vpack.c.b16 %v51, %v50
    %v57 = vpack.c.b16 %v53, %v52
    %vm62 = vcmask 523264
    %v64 = vsel %vm62, %v29, 0
    %66 = vmatpush.bf16.msra.mxu0 0
    %67 = vmatpush.bf16.msra.mxu0 0
    %68 = vmatpush.bf16.msra.mxu0 0
    %69 = vmatpush.bf16.msra.mxu0 0
    %70 = vmatpush.bf16.msra.mxu0 %v57
    %71 = vmatpush.bf16.msra.mxu0 %v56
    %72 = vmatpush.bf16.msra.mxu0 %v55
    %73 = vmatpush.bf16.msra.mxu0 %v54
    %74 = vmatmul.bf16.gmra.mxu0 %v64
    %v75 = vpop.f32.mrf.mxu0
    %v76 = vadd.f32 0.0, %v75
    %v77 = vpop.f32.mrf.mxu0
    %78 = vdwg.mxu0
    %v79 = vadd.f32 %v28, %v76
    %vm80 = vcmask 254976
    %81 = vst.msk [vmem:[#allocation2] sm:$0x3] %vm80, %v79
    // Predicated region
    $region26: #{tpu_custom_call.1} parent=1 // pred_check
      %p82 = pneg %p22
    $region27: #{tpu_custom_call.1} parent=1 // pred_check_branch
      %84 = sbr.rel (%p82) target = $region29
    $region28: #{tpu_custom_call.1} parent=1 // pred_region
      %v85 = vld [vmem:[#allocation2] sm:$0x3]
      %v86 = vld [vmem:[%s2] sm:$0x1]
      %v88 = vperm.slane %v86, 0
      %v90 = vadd.f32 %v85, %v88
      %v91 = vtanh.pop %v90
      %v92 = vpack.c.bf16 %v91, %v91
      %v93 = vld [vmem:[%s3] sm:$0xf]
      %v94 = vld [vmem:[%s3 + $0x4] sm:$0xf]
      %v95 = vld [vmem:[%s3 + $0x8] sm:$0xf]
      %v96 = vld [vmem:[%s3 + $0xc] sm:$0xf]
      %v97 = vld [vmem:[%s4] sm:$0x1]
      %v99 = vperm.slane %v97, 0
      %v105 = vunpack.c.l.b16 %v93
      %v106 = vunpack.c.l.b16 %v94
      %v107 = vunpack.c.l.b16 %v95
      %v108 = vunpack.c.l.b16 %v96
      %v109 = vpack.c.b16 %v106, %v105
      %v110 = vpack.c.b16 %v108, %v107
      %vm113 = vcmask 261120
      %v115 = vsel %vm113, %v92, 0
      %117 = vmatpush.bf16.msra.mxu0 0
      %118 = vmatpush.bf16.msra.mxu0 0
      %119 = vmatpush.bf16.msra.mxu0 0
      %120 = vmatpush.bf16.msra.mxu0 0
      %121 = vmatpush.bf16.msra.mxu0 0
      %122 = vmatpush.bf16.msra.mxu0 0
      %123 = vmatpush.bf16.msra.mxu0 %v110
      %124 = vmatpush.bf16.msra.mxu0 %v109
      %125 = vmatmul.bf16.gmra.mxu0 %v115
      %v126 = vpop.f32.mrf.mxu0
      %v127 = vadd.f32 %v99, %v126
      %v128 = vpop.f32.mrf.mxu0
      %129 = vdwg.mxu0
      %130 = vst [vmem:[#allocation3] sm:$0x3] %v127
    $region29: #{tpu_custom_call.1} parent=1 // pred_fallthru
      _
    // Predicated region
    $region30: #{tpu_custom_call.1} parent=1 // pred_check
      _
    $region31: #{tpu_custom_call.1} parent=1 // pred_check_branch
      %132 = sbr.rel (0) target = $region33
    $region32: #{tpu_custom_call.1} parent=1 // pred_region
      %134 = vsyncadd [#allocation4], 0
      %s136 = sshll.u32 [#allocation3], 4
      %s137 = int_to_ptr.vmem [resolvable:$true] %s136
      %s138 = sshll.u32 %s5, 4
      %s139 = int_to_ptr.hbm [resolvable:$true] %s138
      %141 = dma.vmem_to_hbm [thread:$0]  %s137, 32, %s139, [#allocation4]
    $region33: #{tpu_custom_call.1} parent=1 // pred_fallthru
      _
    // Predicated region
    $region34: #{tpu_custom_call.1} parent=1 // pred_check
      _
    $region35: #{tpu_custom_call.1} parent=1 // pred_check_branch
      %143 = sbr.rel (0) target = $region37
    $region36: #{tpu_custom_call.1} parent=1 // pred_region
      %145 = dma.done [#allocation4], 32
    $region37: #{tpu_custom_call.1} parent=1 // pred_fallthru
      _
    %146 = vsyncpa [#allocation4], 1

</llo_original>
